<compile_context>
chip_gen: v7x
topology: tpu7x:2x2x1
jax: 0.10.0
libtpu: 0.0.40
codegen_flags: <defaults>
</compile_context>

<pallas_src>
import jax
import jax.numpy as jnp
from jax.experimental import pallas as pl
from jax.experimental.pallas import tpu as pltpu


def _scale_kernel(x_ref, scale_ref, o_ref):
    # Pure elementwise hot path: one VPU multiply per vreg.
    o_ref[...] = (x_ref[...] * scale_ref[0, 0]).astype(o_ref.dtype)


_LANE_CANDIDATES = (2048, 1024, 512, 256, 128)


def scale_forward(x, scale, *, target_block_bytes=4 * 1024 * 1024):
    """Computes x * scale with a Pallas TPU kernel (any shape, any dtype)."""
    orig_shape = x.shape
    orig_dtype = x.dtype
    n = x.size
    itemsize = x.dtype.itemsize

    # Keep scale in SMEM (single sld, zero cost for this HBM-bound kernel).
    scale_arr = jnp.asarray(scale, dtype=jnp.float32).reshape(1, 1)

    if n % 128 == 0:
        # Fast path: block the tensor directly, no pad/slice copies, and
        # alias the input buffer to the output.
        lane = next(l for l in _LANE_CANDIDATES if n % l == 0)
        rows = n // lane
        slab = x.reshape(rows, lane)
        padded = False
    else:
        # Ragged path: one element-level pad up to a lane multiple.
        lane = 512 if n > 512 else 128
        n_pad = pl.cdiv(n, lane) * lane
        slab = jnp.pad(x.reshape(-1), (0, n_pad - n)).reshape(-1, lane)
        rows = slab.shape[0]
        padded = True

    # MiB-scale row tile, kept (8,128)-aligned. min(rows, ...) means small
    # inputs use the full row extent as the block (always legal).
    rows_per_block = max(8, (target_block_bytes // (lane * itemsize)) // 8 * 8)
    tile_rows = int(min(rows, rows_per_block))
    grid = (pl.cdiv(rows, tile_rows),)

    out = pl.pallas_call(
        _scale_kernel,
        out_shape=jax.ShapeDtypeStruct((rows, lane), orig_dtype),
        grid_spec=pltpu.PrefetchScalarGridSpec(
            num_scalar_prefetch=0,
            grid=grid,
            in_specs=[
                pl.BlockSpec((tile_rows, lane), lambda i: (i, 0)),
                pl.BlockSpec(memory_space=pltpu.MemorySpace.SMEM),
            ],
            out_specs=pl.BlockSpec((tile_rows, lane), lambda i: (i, 0)),
        ),
        compiler_params=pltpu.CompilerParams(
            dimension_semantics=("parallel",),  # shards row tiles across TCs on v7x
            vmem_limit_bytes=32 * 1024 * 1024,
        ),
        input_output_aliases={} if padded else {0: 0},
    )(slab, scale_arr)

    if padded:
        out = out.reshape(-1)[:n]
    return out.reshape(orig_shape)


if __name__ == "__main__":
    key = jax.random.PRNGKey(0)

    # Small NCHW input consistent with how Scale is used inside NystromAttention.
    x = jax.random.normal(key, (2, 4, 16, 16), dtype=jnp.float32)
    scale = 0.125  # e.g. dim_head ** -0.5 with dim_head = 64

    y = jax.block_until_ready(scale_forward(x, scale))
    assert y.shape == x.shape and y.dtype == x.dtype
    assert jnp.allclose(y, x * scale, atol=1e-6, rtol=1e-6)

    # Also exercise the ragged (size not a multiple of 128) path once.
    x2 = jax.random.normal(jax.random.PRNGKey(1), (3, 5, 7), dtype=jnp.float32)
    y2 = jax.block_until_ready(scale_forward(x2, scale))
    assert y2.shape == x2.shape and y2.dtype == x2.dtype
    assert jnp.allclose(y2, x2 * scale, atol=1e-6, rtol=1e-6)

    print("KERNEL_OK")
</pallas_src>

<mosaic_0001>
module attributes {stable_mosaic.version = 11 : i64} {
  func.func @_scale_kernel(%arg0: i32, %arg1: memref<1x2048xf32, #tpu.memory_space<vmem>>, %arg2: memref<1x1xf32, #tpu.memory_space<smem>>, %arg3: memref<1x2048xf32, #tpu.memory_space<vmem>>) attributes {dimension_semantics = [#tpu.dimension_semantics<parallel>], iteration_bounds = array<i64: 1>, scalar_prefetch = 0 : i64, scratch_operands = 0 : i64, tpu.core_type = #tpu.core_type<tc>, window_params = [{transform_indices = @transform_0, window_bounds = array<i64: 1, 2048>}, {transform_indices = @transform_1, window_bounds = array<i64: 1, 1>}, {transform_indices = @transform_2, window_bounds = array<i64: 1, 2048>}]} {
    %c0 = arith.constant 0 : index
    %c0_0 = arith.constant 0 : index
    %0 = vector.load %arg1[%c0, %c0_0] : memref<1x2048xf32, #tpu.memory_space<vmem>>, vector<1x2048xf32>
    %c0_1 = arith.constant 0 : index
    %c0_2 = arith.constant 0 : index
    %1 = memref.load %arg2[%c0_1, %c0_2] : memref<1x1xf32, #tpu.memory_space<smem>>
    %2 = vector.broadcast %1 : f32 to vector<1x2048xf32>
    %3 = arith.mulf %0, %2 : vector<1x2048xf32>
    %c0_3 = arith.constant 0 : index
    %c0_4 = arith.constant 0 : index
    %4 = vector.load %arg3[%c0_3, %c0_4] : memref<1x2048xf32, #tpu.memory_space<vmem>>, vector<1x2048xf32>
    tpu.vector_store %arg3[%c0_3, %c0_4], %3 {strides = array<i32>} : memref<1x2048xf32, #tpu.memory_space<vmem>>, vector<1x2048xf32>,
    return
  }
  func.func @transform_0(%arg0: i32) -> (i32, i32) {
    %c0_i32 = arith.constant 0 : i32
    %c0_i32_0 = arith.constant 0 : i32
    return %arg0, %c0_i32 : i32, i32
  }
  func.func @transform_1(%arg0: i32) -> (i32, i32) {
    %c0_i32 = arith.constant 0 : i32
    %c0_i32_0 = arith.constant 0 : i32
    %c0_i32_1 = arith.constant 0 : i32
    return %c0_i32, %c0_i32_0 : i32, i32
  }
  func.func @transform_2(%arg0: i32) -> (i32, i32) {
    %c0_i32 = arith.constant 0 : i32
    %c0_i32_0 = arith.constant 0 : i32
    return %arg0, %c0_i32 : i32, i32
  }
}

</mosaic_0001>

<llo_original>
// kernel: tpu_custom_call.1
$region0: #{tpu_custom_call.1}
  #allocation0 [shape = 'u32[]', space=smem, size = 0x4, offset = 0x4, fixed_abs, tag = 'smem constant byte address 0x4 - core index']
  #allocation1 [shape = 'u32[144,128]{1,0:T(1,128)}', space=vmem, size = 0x12000, scoped, tag = 'internal scratch']
  #allocation2 [shape = 'f32[1,1]{1,0:T(1,128)S(6)}', space=smem, size = 0x200, scoped, tag = 'scoped memory for tpu_custom_call.1']
  %s0 = inlined_call_operand.hbm [shape: f32[1,2048], index: 0, kind: input, shape index: {}, may-alias: {0,2}]
  %s1 = inlined_call_operand.<no memory space> [shape: f32[1,1], index: 1, kind: input, shape index: {}]
  %s2 = inlined_call_operand.hbm [shape: f32[1,2048], index: 2, kind: output, shape index: {}, may-alias: {0,2}]
  %s3 = sld [smem:[#allocation0]]
  $region22: #{tpu_custom_call.1} parent=0
    _
  %s5 = ssub.s32 1, %s3
  %s6 = scalar_select 0, %s5, %s3
  %7 = sst [smem:[#allocation2]] %s1
  $region1: #{tpu_custom_call.1} parent=0
    #allocation3 [shape = 'u8[8192]{0}', space=vmem, size = 0x2000, scoped, tag = 'input window, operand 0, single buffered']
    #allocation4 [shape = 's32[1]{0}', space=sflag, size = 0x4, scoped, tag = 'scoped memory for tpu_custom_call.1']
    #allocation5 [shape = 's32[1]{0}', space=sflag, size = 0x4, scoped, tag = 'scoped memory for tpu_custom_call.1']
    #allocation6 [shape = 'u8[8192]{0}', space=vmem, size = 0x2000, scoped, tag = 'output window, operand 0, single buffered']
    %8 = vsyncpa [#allocation4], 0
    %9 = vsyncpa [#allocation5], 0
    // Predicated region
    $region2: #{tpu_custom_call.1} parent=1 // pred_check
      _
    $region3: #{tpu_custom_call.1} parent=1 // pred_check_branch
      %11 = sbr.rel (0) target = $region5
    $region4: #{tpu_custom_call.1} parent=1 // pred_region
      %s13 = ssub.s32 256, 256
      %14 = vsyncadd [#allocation4], %s13
      %s16 = sshll.u32 [#allocation3], 4
      %s17 = int_to_ptr.vmem [resolvable:$true] %s16
      %19 = dma.hbm_to_vmem [thread:$0]  %s0, 256, %s17, [#allocation4]
    $region5: #{tpu_custom_call.1} parent=1 // pred_fallthru
      _
    // Predicated region
    $region6: #{tpu_custom_call.1} parent=1 // pred_check
      _
    $region7: #{tpu_custom_call.1} parent=1 // pred_check_branch
      %21 = sbr.rel (0) target = $region9
    $region8: #{tpu_custom_call.1} parent=1 // pred_region
      _
    $region9: #{tpu_custom_call.1} parent=1 // pred_fallthru
      _
    // Predicated region
    $region10: #{tpu_custom_call.1} parent=1 // pred_check
      _
    $region11: #{tpu_custom_call.1} parent=1 // pred_check_branch
      %23 = sbr.rel (0) target = $region13
    $region12: #{tpu_custom_call.1} parent=1 // pred_region
      %24 = dma.done [#allocation4], 256
    $region13: #{tpu_custom_call.1} parent=1 // pred_fallthru
      _
    %v25 = vld [vmem:[#allocation3] sm:$0xff]
    %v26 = vld [vmem:[#allocation3 + $0x8] sm:$0xff]
    %s27 = sld [smem:[#allocation2]]
    %v28 = vstv %s27
    %v29 = vmul.f32 %v25, %v28
    %v30 = vmul.f32 %v26, %v28
    %31 = vst [vmem:[#allocation6] sm:$0xff] %v29
    %32 = vst [vmem:[#allocation6 + $0x8] sm:$0xff] %v30
    // Predicated region
    $region14: #{tpu_custom_call.1} parent=1 // pred_check
      _
    $region15: #{tpu_custom_call.1} parent=1 // pred_check_branch
      %34 = sbr.rel (0) target = $region17
    $region16: #{tpu_custom_call.1} parent=1 // pred_region
      %s36 = ssub.s32 256, 256
      %37 = vsyncadd [#allocation5], %s36
      %s39 = sshll.u32 [#allocation6], 4
      %s40 = int_to_ptr.vmem [resolvable:$true] %s39
      %42 = dma.vmem_to_hbm [thread:$0]  %s40, 256, %s2, [#allocation5]
    $region17: #{tpu_custom_call.1} parent=1 // pred_fallthru
      _
    // Predicated region
    $region18: #{tpu_custom_call.1} parent=1 // pred_check
      _
    $region19: #{tpu_custom_call.1} parent=1 // pred_check_branch
      %44 = sbr.rel (0) target = $region21
    $region20: #{tpu_custom_call.1} parent=1 // pred_region
      %45 = dma.done [#allocation5], 256
    $region21: #{tpu_custom_call.1} parent=1 // pred_fallthru
      _
    %46 = vsyncpa [#allocation4], 1
    %47 = vsyncpa [#allocation5], 1

</llo_original>
